<compile_context>
chip_gen: v7x
topology: tpu7x:2x2x1
jax: 0.10.0
libtpu: 0.0.40
codegen_flags: <defaults>
</compile_context>

<pallas_src>
import functools

import jax
import jax.numpy as jnp
import numpy as np
from jax.experimental import pallas as pl
from jax.experimental.pallas import tpu as pltpu


def cutdown_kernel(xcol_ref, w_ref, t_ref, out_ref, y_scr,
                   *, b_img, cout, npad, neg_slope):
    """One batch of `b_img` images per grid step.

    xcol_ref: (b_img, K, H*W)     bf16  im2col patches (+ ones row, zero-padded K)
    w_ref:    (cout, K)           bf16  conv weights (+ bias column, zero-padded K)
    t_ref:    (H*W, 2*npad)       bf16  fused [Re | 0 | Im | 0] fft2->crop->/4->ifft2 matrix
    out_ref:  (b_img*cout, npad)  f32   |ifft2(center_crop(fft2(y)) / 4)|, lane-padded
    y_scr:    (b_img*cout, H*W)   f32   stacked conv + LeakyReLU activations
    """
    # --- conv3x3 (+bias folded in) per image on the MXU, f32 LeakyReLU epilogue
    for b in range(b_img):  # static unroll, b_img is small
        y = jnp.dot(w_ref[...], xcol_ref[b], preferred_element_type=jnp.float32)
        y_scr[b * cout:(b + 1) * cout, :] = jnp.where(y >= 0.0, y, neg_slope * y)

    # --- whole spectral pipeline = ONE batched MXU matmul --------------------
    z = jnp.dot(y_scr[...].astype(jnp.bfloat16), t_ref[...],
                preferred_element_type=jnp.float32)      # (b_img*cout, 2*npad) f32
    zr = z[:, :npad]          # 128-lane-aligned slices -> free
    zi = z[:, npad:]
    out_ref[...] = jnp.sqrt(zr * zr + zi * zi)


def _spectral_matrix(hh, ww, npad):
    """Real (H*W, 2*npad) matrix mapping a flattened spatial image to
    [Re | pad | Im | pad] of ifft2(center_crop(fft2(img)) / 4).
    Exact fp64 fold of forward DFT, spectral crop, /4 and normalized inverse DFT."""
    h2, w2 = hh // 2, ww // 2
    nout = h2 * w2
    offh, offw = h2 // 2, w2 // 2
    fh = np.exp(-2j * np.pi * np.outer(np.arange(hh), offh + np.arange(h2)) / hh)
    fw = np.exp(-2j * np.pi * np.outer(np.arange(ww), offw + np.arange(w2)) / ww)
    eh = np.exp(2j * np.pi * np.outer(np.arange(h2), np.arange(h2)) / h2)
    ew = np.exp(2j * np.pi * np.outer(np.arange(w2), np.arange(w2)) / w2)
    th = fh @ eh / (2.0 * h2)                               # (hh, h2)
    tw = fw @ ew / (2.0 * w2)                               # (ww, w2)
    t = np.einsum('hp,wq->hwpq', th, tw).reshape(hh * ww, nout)
    out = np.zeros((hh * ww, 2 * npad), np.float32)
    out[:, :nout] = t.real
    out[:, npad:npad + nout] = t.imag
    return out


def _im2col_bf16(x, hh, ww, k_aligned):
    """(N, Cin, H, W) -> (N, K, H*W) bf16 patches with a ones row (bias) and
    zero rows up to K=k_aligned. Pure layout plumbing; MACs run on the MXU."""
    n, cin = x.shape[0], x.shape[1]
    xpad = jnp.pad(x.astype(jnp.bfloat16), ((0, 0), (0, 0), (1, 1), (1, 1)))
    cols = [xpad[:, :, kh:kh + hh, kw:kw + ww]
            for kh in range(3) for kw in range(3)]          # 9 x (N, Cin, H, W)
    xcol = jnp.stack(cols, axis=2).reshape(n, cin * 9, hh * ww)
    ones = jnp.ones((n, 1, hh * ww), jnp.bfloat16)          # bias row
    pad = jnp.zeros((n, k_aligned - cin * 9 - 1, hh * ww), jnp.bfloat16)
    return jnp.concatenate([xcol, ones, pad], axis=1)


def _pick_batch_block(n, max_b=8):
    """Largest divisor of n that is <= max_b (images per grid step)."""
    for b in range(min(n, max_b), 0, -1):
        if n % b == 0:
            return b
    return 1


def cutdown_forward(x, weight, bias, *, negative_slope=0.1, max_images_per_step=8):
    n, cin, hh, ww = x.shape
    cout = weight.shape[0]
    assert hh % 4 == 0 and ww % 4 == 0, "H and W must be divisible by 4"
    h2, w2 = hh // 2, ww // 2
    nout = h2 * w2
    npad = ((nout + 127) // 128) * 128                       # lane-aligned Re/Im blocks
    k_aligned = ((cin * 9 + 1 + 15) // 16) * 16              # bf16 sublane-aligned K

    b_img = _pick_batch_block(n, max_images_per_step)
    n_steps = n // b_img

    # Wrapper-side layout prep (bf16 end-to-end, no f32 HBM intermediates).
    xcol = _im2col_bf16(x, hh, ww, k_aligned)                # (N, K, H*W) bf16
    wmat = jnp.concatenate(
        [weight.reshape(cout, cin * 9).astype(jnp.float32),
         bias.reshape(cout, 1).astype(jnp.float32),          # bias column
         jnp.zeros((cout, k_aligned - cin * 9 - 1), jnp.float32)],
        axis=1).astype(jnp.bfloat16)                         # (Cout, K) bf16
    tmat = jnp.asarray(_spectral_matrix(hh, ww, npad), jnp.bfloat16)  # (H*W, 2*npad)

    kernel = functools.partial(cutdown_kernel, b_img=b_img, cout=cout,
                               npad=npad, neg_slope=negative_slope)

    grid_spec = pltpu.PrefetchScalarGridSpec(
        num_scalar_prefetch=0,
        grid=(n_steps,),
        in_specs=[
            pl.BlockSpec((b_img, k_aligned, hh * ww), lambda i: (i, 0, 0)),  # patches
            pl.BlockSpec((cout, k_aligned), lambda i: (0, 0)),               # weights+bias
            pl.BlockSpec((hh * ww, 2 * npad), lambda i: (0, 0)),             # fused DFT
        ],
        out_specs=pl.BlockSpec((b_img * cout, npad), lambda i: (i, 0)),
        scratch_shapes=[pltpu.VMEM((b_img * cout, hh * ww), jnp.float32)],
    )

    out = pl.pallas_call(
        kernel,
        out_shape=jax.ShapeDtypeStruct((n * cout, npad), jnp.float32),
        grid_spec=grid_spec,
        compiler_params=pltpu.CompilerParams(
            dimension_semantics=("parallel",),
            vmem_limit_bytes=32 * 1024 * 1024),
    )(xcol, wmat, tmat)

    return out[:, :nout].reshape(n, cout, h2, w2)


def reference(x, weight, bias):
    # pure-JAX reference mirroring the PyTorch forward
    y = jax.lax.conv_general_dilated(
        x, weight, window_strides=(1, 1), padding=((1, 1), (1, 1)),
        dimension_numbers=('NCHW', 'OIHW', 'NCHW'),
        precision=jax.lax.Precision.HIGHEST)
    y = y + bias[None, :, None, None]
    y = jnp.where(y >= 0.0, y, 0.1 * y)
    f = jnp.fft.fft2(y)
    hh, ww = y.shape[2], y.shape[3]
    mr, mc = hh // 2, ww // 2
    fc = f[:, :, mr // 2:3 * mr // 2, mc // 2:3 * mc // 2] / 4.0
    return jnp.abs(jnp.fft.ifft2(fc))


if __name__ == "__main__":
    key = jax.random.PRNGKey(0)
    k1, k2, k3 = jax.random.split(key, 3)
    N, CIN, COUT, H, W = 2, 4, 8, 16, 16

    x = jax.random.normal(k1, (N, CIN, H, W), dtype=jnp.float32)
    weight = 0.1 * jax.random.normal(k2, (COUT, CIN, 3, 3), dtype=jnp.float32)
    bias = 0.05 * jax.random.normal(k3, (COUT,), dtype=jnp.float32)

    out = cutdown_forward(x, weight, bias)
    out = jax.block_until_ready(out)

    ref = reference(x, weight, bias)
    # bf16 MXU operands with f32 accumulation: typical error ~1e-3 at these
    # reduction lengths; modest tolerance covers tail elements.
    np.testing.assert_allclose(np.asarray(out), np.asarray(ref), rtol=2e-2, atol=2e-2)
    print("KERNEL_OK")
</pallas_src>

<mosaic_0001>
module attributes {stable_mosaic.version = 11 : i64} {
  func.func @cutdown_kernel(%arg0: i32, %arg1: memref<2x48x256xbf16, #tpu.memory_space<vmem>>, %arg2: memref<8x48xbf16, #tpu.memory_space<vmem>>, %arg3: memref<256x256xbf16, #tpu.memory_space<vmem>>, %arg4: memref<16x128xf32, #tpu.memory_space<vmem>>, %arg5: memref<16x256xf32, #tpu.memory_space<vmem>>) attributes {dimension_semantics = [#tpu.dimension_semantics<parallel>], iteration_bounds = array<i64: 1>, scalar_prefetch = 0 : i64, scratch_operands = 1 : i64, tpu.core_type = #tpu.core_type<tc>, window_params = [{transform_indices = @transform_0, window_bounds = array<i64: 2, 48, 256>}, {pipeline_mode = #tpu.pipeline_mode<synchronous>, transform_indices = @transform_1, window_bounds = array<i64: 8, 48>}, {pipeline_mode = #tpu.pipeline_mode<synchronous>, transform_indices = @transform_2, window_bounds = array<i64: 256, 256>}, {transform_indices = @transform_3, window_bounds = array<i64: 16, 128>}]} {
    %c0 = arith.constant 0 : index
    %c0_0 = arith.constant 0 : index
    %0 = vector.load %arg2[%c0, %c0_0] : memref<8x48xbf16, #tpu.memory_space<vmem>>, vector<8x48xbf16>
    %c0_1 = arith.constant 0 : index
    %c0_2 = arith.constant 0 : index
    %c0_3 = arith.constant 0 : index
    %1 = vector.load %arg1[%c0_1, %c0_2, %c0_3] : memref<2x48x256xbf16, #tpu.memory_space<vmem>>, vector<1x48x256xbf16>
    %2 = vector.shape_cast %1 : vector<1x48x256xbf16> to vector<48x256xbf16>
    %cst = arith.constant dense<0.000000e+00> : vector<8x256xf32>
    %3 = tpu.matmul %0, %2, %cst {dimension_numbers = #tpu.dot_dimension_numbers<[1], [0], [0], [1], [0, 0, 1, 1], [], []>} : vector<8x48xbf16>, vector<48x256xbf16>, vector<8x256xf32> -> vector<8x256xf32>
    %cst_4 = arith.constant 0.000000e+00 : f32
    %4 = vector.broadcast %cst_4 : f32 to vector<8x256xf32>
    %5 = arith.cmpf oge, %3, %4 : vector<8x256xf32>
    %cst_5 = arith.constant 1.000000e-01 : f32
    %6 = vector.broadcast %cst_5 : f32 to vector<8x256xf32>
    %7 = arith.mulf %6, %3 : vector<8x256xf32>
    %8 = arith.select %5, %3, %7 : vector<8x256xi1>, vector<8x256xf32>
    %c0_6 = arith.constant 0 : index
    %c0_7 = arith.constant 0 : index
    %9 = vector.load %arg5[%c0_6, %c0_7] : memref<16x256xf32, #tpu.memory_space<vmem>>, vector<8x256xf32>
    tpu.vector_store %arg5[%c0_6, %c0_7], %8 {strides = array<i32>} : memref<16x256xf32, #tpu.memory_space<vmem>>, vector<8x256xf32>,
    %c0_8 = arith.constant 0 : index
    %c0_9 = arith.constant 0 : index
    %10 = vector.load %arg2[%c0_8, %c0_9] : memref<8x48xbf16, #tpu.memory_space<vmem>>, vector<8x48xbf16>
    %c1 = arith.constant 1 : index
    %c0_10 = arith.constant 0 : index
    %c0_11 = arith.constant 0 : index
    %11 = vector.load %arg1[%c1, %c0_10, %c0_11] : memref<2x48x256xbf16, #tpu.memory_space<vmem>>, vector<1x48x256xbf16>
    %12 = vector.shape_cast %11 : vector<1x48x256xbf16> to vector<48x256xbf16>
    %cst_12 = arith.constant dense<0.000000e+00> : vector<8x256xf32>
    %13 = tpu.matmul %10, %12, %cst_12 {dimension_numbers = #tpu.dot_dimension_numbers<[1], [0], [0], [1], [0, 0, 1, 1], [], []>} : vector<8x48xbf16>, vector<48x256xbf16>, vector<8x256xf32> -> vector<8x256xf32>
    %cst_13 = arith.constant 0.000000e+00 : f32
    %14 = vector.broadcast %cst_13 : f32 to vector<8x256xf32>
    %15 = arith.cmpf oge, %13, %14 : vector<8x256xf32>
    %cst_14 = arith.constant 1.000000e-01 : f32
    %16 = vector.broadcast %cst_14 : f32 to vector<8x256xf32>
    %17 = arith.mulf %16, %13 : vector<8x256xf32>
    %18 = arith.select %15, %13, %17 : vector<8x256xi1>, vector<8x256xf32>
    %c8 = arith.constant 8 : index
    %c0_15 = arith.constant 0 : index
    %19 = vector.load %arg5[%c8, %c0_15] : memref<16x256xf32, #tpu.memory_space<vmem>>, vector<8x256xf32>
    tpu.vector_store %arg5[%c8, %c0_15], %18 {strides = array<i32>} : memref<16x256xf32, #tpu.memory_space<vmem>>, vector<8x256xf32>,
    %c0_16 = arith.constant 0 : index
    %c0_17 = arith.constant 0 : index
    %20 = vector.load %arg5[%c0_16, %c0_17] : memref<16x256xf32, #tpu.memory_space<vmem>>, vector<16x256xf32>
    %21 = arith.truncf %20 : vector<16x256xf32> to vector<16x256xbf16>
    %c0_18 = arith.constant 0 : index
    %c0_19 = arith.constant 0 : index
    %22 = vector.load %arg3[%c0_18, %c0_19] : memref<256x256xbf16, #tpu.memory_space<vmem>>, vector<256x256xbf16>
    %cst_20 = arith.constant dense<0.000000e+00> : vector<16x256xf32>
    %23 = tpu.matmul %21, %22, %cst_20 {dimension_numbers = #tpu.dot_dimension_numbers<[1], [0], [0], [1], [0, 0, 1, 1], [], []>} : vector<16x256xbf16>, vector<256x256xbf16>, vector<16x256xf32> -> vector<16x256xf32>
    %24 = vector.extract_strided_slice %23 {offsets = [0, 0], sizes = [16, 128], strides = [1, 1]} : vector<16x256xf32> to vector<16x128xf32>
    %25 = vector.extract_strided_slice %23 {offsets = [0, 128], sizes = [16, 128], strides = [1, 1]} : vector<16x256xf32> to vector<16x128xf32>
    %26 = arith.mulf %24, %24 : vector<16x128xf32>
    %27 = arith.mulf %25, %25 : vector<16x128xf32>
    %28 = arith.addf %26, %27 : vector<16x128xf32>
    %29 = math.sqrt %28 : vector<16x128xf32>
    %c0_21 = arith.constant 0 : index
    %c0_22 = arith.constant 0 : index
    %30 = vector.load %arg4[%c0_21, %c0_22] : memref<16x128xf32, #tpu.memory_space<vmem>>, vector<16x128xf32>
    tpu.vector_store %arg4[%c0_21, %c0_22], %29 {strides = array<i32>} : memref<16x128xf32, #tpu.memory_space<vmem>>, vector<16x128xf32>,
    return
  }
  func.func @transform_0(%arg0: i32) -> (i32, i32, i32) {
    %c0_i32 = arith.constant 0 : i32
    %c0_i32_0 = arith.constant 0 : i32
    %c0_i32_1 = arith.constant 0 : i32
    return %arg0, %c0_i32, %c0_i32_0 : i32, i32, i32
  }
  func.func @transform_1(%arg0: i32) -> (i32, i32) {
    %c0_i32 = arith.constant 0 : i32
    %c0_i32_0 = arith.constant 0 : i32
    %c0_i32_1 = arith.constant 0 : i32
    return %c0_i32, %c0_i32_0 : i32, i32
  }
  func.func @transform_2(%arg0: i32) -> (i32, i32) {
    %c0_i32 = arith.constant 0 : i32
    %c0_i32_0 = arith.constant 0 : i32
    %c0_i32_1 = arith.constant 0 : i32
    return %c0_i32, %c0_i32_0 : i32, i32
  }
  func.func @transform_3(%arg0: i32) -> (i32, i32) {
    %c0_i32 = arith.constant 0 : i32
    %c0_i32_0 = arith.constant 0 : i32
    return %arg0, %c0_i32 : i32, i32
  }
}

</mosaic_0001>

<llo_original>
// kernel: tpu_custom_call.1
$region0: #{tpu_custom_call.1}
  #allocation0 [shape = 'u32[]', space=smem, size = 0x4, offset = 0x4, fixed_abs, tag = 'smem constant byte address 0x4 - core index']
  #allocation1 [shape = 'u32[144,128]{1,0:T(1,128)}', space=vmem, size = 0x12000, scoped, tag = 'internal scratch']
  #allocation2 [shape = 'f32[16,256]{1,0:T(8,128)}', space=vmem, size = 0x4000, scoped, tag = 'scratch operand']
  %s0 = inlined_call_operand.hbm [shape: bf16[2,48,256], index: 0, kind: input, shape index: {}]
  %s1 = inlined_call_operand.hbm [shape: bf16[8,48], index: 1, kind: input, shape index: {}]
  %s2 = inlined_call_operand.hbm [shape: bf16[256,256], index: 2, kind: input, shape index: {}]
  %s3 = inlined_call_operand.hbm [shape: f32[16,128], index: 3, kind: output, shape index: {}]
  %s4 = sld [smem:[#allocation0]]
  $region34: #{tpu_custom_call.1} parent=0
    _
  %s6 = ssub.s32 1, %s4
  %s7 = scalar_select 0, %s6, %s4
  $region1: #{tpu_custom_call.1} parent=0
    #allocation3 [shape = 'u8[49152]{0}', space=vmem, size = 0xc000, scoped, tag = 'input window, operand 0, single buffered']
    #allocation4 [shape = 's32[1]{0}', space=sflag, size = 0x4, scoped, tag = 'scoped memory for tpu_custom_call.1']
    #allocation5 [shape = 's32[1]{0}', space=sflag, size = 0x4, scoped, tag = 'scoped memory for tpu_custom_call.1']
    #allocation6 [shape = 'u8[2048]{0}', space=vmem, size = 0x800, scoped, tag = 'input window, operand 1, single buffered']
    #allocation7 [shape = 's32[1]{0}', space=sflag, size = 0x4, scoped, tag = 'scoped memory for tpu_custom_call.1']
    #allocation8 [shape = 'u8[131072]{0}', space=vmem, size = 0x20000, scoped, tag = 'input window, operand 2, single buffered']
    #allocation9 [shape = 'u8[8192]{0}', space=vmem, size = 0x2000, scoped, tag = 'output window, operand 0, single buffered']
    %8 = vsyncpa [#allocation4], 0
    %9 = vsyncpa [#allocation7], 0
    %10 = vsyncpa [#allocation5], 0
    // Predicated region
    $region2: #{tpu_custom_call.1} parent=1 // pred_check
      _
    $region3: #{tpu_custom_call.1} parent=1 // pred_check_branch
      %12 = sbr.rel (0) target = $region5
    $region4: #{tpu_custom_call.1} parent=1 // pred_region
      %s14 = ssub.s32 1536, 1536
      %15 = vsyncadd [#allocation4], %s14
      %s16 = sshll.u32 [#allocation3], 4
      %s17 = int_to_ptr.vmem [resolvable:$true] %s16
      %22 = dma.hbm_to_vmem [thread:$0]  %s0, 1536, %s17, [#allocation4], 128, 128, 8
    $region5: #{tpu_custom_call.1} parent=1 // pred_fallthru
      _
    // Predicated region
    $region6: #{tpu_custom_call.1} parent=1 // pred_check
      _
    $region7: #{tpu_custom_call.1} parent=1 // pred_check_branch
      %24 = sbr.rel (0) target = $region9
    $region8: #{tpu_custom_call.1} parent=1 // pred_region
      %s26 = ssub.s32 64, 64
      %27 = vsyncadd [#allocation7], %s26
      %s29 = sshll.u32 [#allocation6], 4
      %s30 = int_to_ptr.vmem [resolvable:$true] %s29
      %32 = dma.hbm_to_vmem [thread:$0]  %s1, 64, %s30, [#allocation7]
    $region9: #{tpu_custom_call.1} parent=1 // pred_fallthru
      _
    // Predicated region
    $region10: #{tpu_custom_call.1} parent=1 // pred_check
      _
    $region11: #{tpu_custom_call.1} parent=1 // pred_check_branch
      %34 = sbr.rel (0) target = $region13
    $region12: #{tpu_custom_call.1} parent=1 // pred_region
      %s36 = ssub.s32 4096, 4096
      %37 = vsyncadd [#allocation7], %s36
      %s38 = sshll.u32 [#allocation8], 4
      %s39 = int_to_ptr.vmem [resolvable:$true] %s38
      %44 = dma.hbm_to_vmem [thread:$0]  %s2, 4096, %s39, [#allocation7], 128, 128, 8
    $region13: #{tpu_custom_call.1} parent=1 // pred_fallthru
      _
    // Predicated region
    $region14: #{tpu_custom_call.1} parent=1 // pred_check
      _
    $region15: #{tpu_custom_call.1} parent=1 // pred_check_branch
      %46 = sbr.rel (0) target = $region17
    $region16: #{tpu_custom_call.1} parent=1 // pred_region
      %47 = dma.done [#allocation4], 1536
    $region17: #{tpu_custom_call.1} parent=1 // pred_fallthru
      _
    // Predicated region
    $region18: #{tpu_custom_call.1} parent=1 // pred_check
      _
    $region19: #{tpu_custom_call.1} parent=1 // pred_check_branch
      %49 = sbr.rel (0) target = $region21
    $region20: #{tpu_custom_call.1} parent=1 // pred_region
      %50 = dma.done [#allocation7], 64
    $region21: #{tpu_custom_call.1} parent=1 // pred_fallthru
      _
    // Predicated region
    $region22: #{tpu_custom_call.1} parent=1 // pred_check
      _
    $region23: #{tpu_custom_call.1} parent=1 // pred_check_branch
      %52 = sbr.rel (0) target = $region25
    $region24: #{tpu_custom_call.1} parent=1 // pred_region
      %53 = dma.done [#allocation7], 4096
    $region25: #{tpu_custom_call.1} parent=1 // pred_fallthru
      _
    %v55 = vld [vmem:[#allocation6] sm:$0xf]
    %v56 = vld [vmem:[#allocation3] sm:$0xff]
    %v57 = vld [vmem:[#allocation3 + $0x8] sm:$0xff]
    %v58 = vld [vmem:[#allocation3 + $0x10] sm:$0xff]
    %v59 = vld [vmem:[#allocation3 + $0x18] sm:$0xff]
    %v60 = vld [vmem:[#allocation3 + $0x20] sm:$0xff]
    %v61 = vld [vmem:[#allocation3 + $0x28] sm:$0xff]
    %v68 = vunpack.c.l.b16 %v56
    %v69 = vunpack.c.h.b16 %v56
    %v70 = vunpack.c.l.b16 %v57
    %v71 = vunpack.c.h.b16 %v57
    %v72 = vunpack.c.l.b16 %v58
    %v73 = vunpack.c.h.b16 %v58
    %v74 = vunpack.c.l.b16 %v59
    %v75 = vunpack.c.h.b16 %v59
    %v76 = vunpack.c.l.b16 %v60
    %v77 = vunpack.c.h.b16 %v60
    %v78 = vunpack.c.l.b16 %v61
    %v79 = vunpack.c.h.b16 %v61
    %v80 = vpack.c.b16 %v70, %v68
    %v81 = vpack.c.b16 %v71, %v69
    %v82 = vpack.c.b16 %v74, %v72
    %v83 = vpack.c.b16 %v75, %v73
    %v84 = vpack.c.b16 %v78, %v76
    %v85 = vpack.c.b16 %v79, %v77
    %vm92 = vcmask 392192
    %v94 = vsel %vm92, %v55, 0
    %96 = vmatprep.subr.bf16.mxu0 %v81
    %97 = vmatpush1.bf16.msra.mxu0 %v80
    %98 = vmatprep.subr.bf16.mxu0 %v83
    %99 = vmatpush1.bf16.msra.mxu0 %v82
    %100 = vmatprep.subr.bf16.mxu0 %v85
    %101 = vmatpush1.bf16.msra.mxu0 %v84
    %102 = vmatprep.subr.bf16.mxu0 0
    %103 = vmatpush1.bf16.msra.mxu0 0
    %104 = vmatprep.subr.bf16.mxu0 0
    %105 = vmatpush1.bf16.msra.mxu0 0
    %106 = vmatprep.subr.bf16.mxu0 0
    %107 = vmatpush1.bf16.msra.mxu0 0
    %108 = vmatprep.subr.bf16.mxu0 0
    %109 = vmatpush1.bf16.msra.mxu0 0
    %110 = vmatprep.subr.bf16.mxu0 0
    %111 = vmatpush1.bf16.msra.mxu0 0
    %112 = vmatprep.subr.bf16.mxu0 0
    %113 = vmatpush1.bf16.msra.mxu0 0
    %114 = vmatprep.subr.bf16.mxu0 0
    %115 = vmatpush1.bf16.msra.mxu0 0
    %116 = vmatprep.subr.bf16.mxu0 0
    %117 = vmatpush1.bf16.msra.mxu0 0
    %118 = vmatprep.subr.bf16.mxu0 0
    %119 = vmatpush1.bf16.msra.mxu0 0
    %120 = vmatprep.subr.bf16.mxu0 0
    %121 = vmatpush1.bf16.msra.mxu0 0
    %122 = vmatprep.subr.bf16.mxu0 0
    %123 = vmatpush1.bf16.msra.mxu0 0
    %124 = vmatprep.subr.bf16.mxu0 0
    %125 = vmatpush1.bf16.msra.mxu0 0
    %126 = vmatprep.subr.bf16.mxu0 0
    %127 = vmatpush1.bf16.msra.mxu0 0
    %128 = vmatprep.mubr.bf16.mxu0 0
    %129 = vmatmul.mubr.bf16.gmra.mrb[0].mxu0 %v94
    %v130 = vpop.f32.mrb[0].mxu0
    %v131 = vadd.f32 0.0, %v130
    %v132 = vpop.f32.mrb[0].mxu0
    %v133 = vadd.f32 0.0, %v132
    %v134 = vpop.f32.mrb[0].mxu0
    %v135 = vpop.f32.mrb[0].mxu0
    %136 = vdwg.mxu0
    %vm137 = vcmp.ge.f32.partialorder %v131, 0.0
    %vm138 = vcmp.ge.f32.partialorder %v133, 0.0
    %v139 = vmul.f32 %v131, 0.1
    %v140 = vmul.f32 %v133, 0.1
    %v141 = vsel %vm137, %v131, %v139
    %v142 = vsel %vm138, %v133, %v140
    %143 = vst [vmem:[#allocation2] sm:$0xff] %v141
    %144 = vst [vmem:[#allocation2 + $0x8] sm:$0xff] %v142
    %v145 = vld [vmem:[#allocation6] sm:$0xf]
    %s146 = scalar_lea.vmem [#allocation3], 48
    %v147 = vld [vmem:[%s146] sm:$0xff]
    %v148 = vld [vmem:[%s146 + $0x8] sm:$0xff]
    %v149 = vld [vmem:[%s146 + $0x10] sm:$0xff]
    %v150 = vld [vmem:[%s146 + $0x18] sm:$0xff]
    %v151 = vld [vmem:[%s146 + $0x20] sm:$0xff]
    %v152 = vld [vmem:[%s146 + $0x28] sm:$0xff]
    %v159 = vunpack.c.l.b16 %v147
    %v160 = vunpack.c.h.b16 %v147
    %v161 = vunpack.c.l.b16 %v148
    %v162 = vunpack.c.h.b16 %v148
    %v163 = vunpack.c.l.b16 %v149
    %v164 = vunpack.c.h.b16 %v149
    %v165 = vunpack.c.l.b16 %v150
    %v166 = vunpack.c.h.b16 %v150
    %v167 = vunpack.c.l.b16 %v151
    %v168 = vunpack.c.h.b16 %v151
    %v169 = vunpack.c.l.b16 %v152
    %v170 = vunpack.c.h.b16 %v152
    %v171 = vpack.c.b16 %v161, %v159
    %v172 = vpack.c.b16 %v162, %v160
    %v173 = vpack.c.b16 %v165, %v163
    %v174 = vpack.c.b16 %v166, %v164
    %v175 = vpack.c.b16 %v169, %v167
    %v176 = vpack.c.b16 %v170, %v168
    %v184 = vsel %vm92, %v145, 0
    %186 = vmatprep.subr.bf16.mxu0 %v172
    %187 = vmatpush1.bf16.msra.mxu0 %v171
    %188 = vmatprep.subr.bf16.mxu0 %v174
    %189 = vmatpush1.bf16.msra.mxu0 %v173
    %190 = vmatprep.subr.bf16.mxu0 %v176
    %191 = vmatpush1.bf16.msra.mxu0 %v175
    %192 = vmatprep.subr.bf16.mxu0 0
    %193 = vmatpush1.bf16.msra.mxu0 0
    %194 = vmatprep.subr.bf16.mxu0 0
    %195 = vmatpush1.bf16.msra.mxu0 0
    %196 = vmatprep.subr.bf16.mxu0 0
    %197 = vmatpush1.bf16.msra.mxu0 0
    %198 = vmatprep.subr.bf16.mxu0 0
    %199 = vmatpush1.bf16.msra.mxu0 0
    %200 = vmatprep.subr.bf16.mxu0 0
    %201 = vmatpush1.bf16.msra.mxu0 0
    %202 = vmatprep.subr.bf16.mxu0 0
    %203 = vmatpush1.bf16.msra.mxu0 0
    %204 = vmatprep.subr.bf16.mxu0 0
    %205 = vmatpush1.bf16.msra.mxu0 0
    %206 = vmatprep.subr.bf16.mxu0 0
    %207 = vmatpush1.bf16.msra.mxu0 0
    %208 = vmatprep.subr.bf16.mxu0 0
    %209 = vmatpush1.bf16.msra.mxu0 0
    %210 = vmatprep.subr.bf16.mxu0 0
    %211 = vmatpush1.bf16.msra.mxu0 0
    %212 = vmatprep.subr.bf16.mxu0 0
    %213 = vmatpush1.bf16.msra.mxu0 0
    %214 = vmatprep.subr.bf16.mxu0 0
    %215 = vmatpush1.bf16.msra.mxu0 0
    %216 = vmatprep.subr.bf16.mxu0 0
    %217 = vmatpush1.bf16.msra.mxu0 0
    %218 = vmatprep.mubr.bf16.mxu0 0
    %219 = vmatmul.mubr.bf16.gmra.mrb[0].mxu0 %v184
    %v220 = vpop.f32.mrb[0].mxu0
    %v221 = vadd.f32 0.0, %v220
    %v222 = vpop.f32.mrb[0].mxu0
    %v223 = vadd.f32 0.0, %v222
    %v224 = vpop.f32.mrb[0].mxu0
    %v225 = vpop.f32.mrb[0].mxu0
    %226 = vdwg.mxu0
    %vm227 = vcmp.ge.f32.partialorder %v221, 0.0
    %vm228 = vcmp.ge.f32.partialorder %v223, 0.0
    %v229 = vmul.f32 %v221, 0.1
    %v230 = vmul.f32 %v223, 0.1
    %v231 = vsel %vm227, %v221, %v229
    %v232 = vsel %vm228, %v223, %v230
    %233 = vst [vmem:[#allocation2 + $0x10] sm:$0xff] %v231
    %234 = vst [vmem:[#allocation2 + $0x18] sm:$0xff] %v232
    %v235 = vld [vmem:[#allocation2] sm:$0xff]
    %v236 = vld [vmem:[#allocation2 + $0x8] sm:$0xff]
    %v237 = vld [vmem:[#allocation2 + $0x10] sm:$0xff]
    %v238 = vld [vmem:[#allocation2 + $0x18] sm:$0xff]
    %v239 = vpack.c.bf16 %v237, %v235
    %v240 = vpack.c.bf16 %v238, %v236
    %v241 = vld [vmem:[#allocation8] sm:$0xff]
    %v242 = vld [vmem:[#allocation8 + $0x8] sm:$0xff]
    %v243 = vld [vmem:[#allocation8 + $0x10] sm:$0xff]
    %v244 = vld [vmem:[#allocation8 + $0x18] sm:$0xff]
    %v245 = vld [vmem:[#allocation8 + $0x20] sm:$0xff]
    %v246 = vld [vmem:[#allocation8 + $0x28] sm:$0xff]
    %v247 = vld [vmem:[#allocation8 + $0x30] sm:$0xff]
    %v248 = vld [vmem:[#allocation8 + $0x38] sm:$0xff]
    %v249 = vld [vmem:[#allocation8 + $0x40] sm:$0xff]
    %v250 = vld [vmem:[#allocation8 + $0x48] sm:$0xff]
    %v251 = vld [vmem:[#allocation8 + $0x50] sm:$0xff]
    %v252 = vld [vmem:[#allocation8 + $0x58] sm:$0xff]
    %v253 = vld [vmem:[#allocation8 + $0x60] sm:$0xff]
    %v254 = vld [vmem:[#allocation8 + $0x68] sm:$0xff]
    %v255 = vld [vmem:[#allocation8 + $0x70] sm:$0xff]
    %v256 = vld [vmem:[#allocation8 + $0x78] sm:$0xff]
    %v257 = vld [vmem:[#allocation8 + $0x80] sm:$0xff]
    %v258 = vld [vmem:[#allocation8 + $0x88] sm:$0xff]
    %v259 = vld [vmem:[#allocation8 + $0x90] sm:$0xff]
    %v260 = vld [vmem:[#allocation8 + $0x98] sm:$0xff]
    %v261 = vld [vmem:[#allocation8 + $0xa0] sm:$0xff]
    %v262 = vld [vmem:[#allocation8 + $0xa8] sm:$0xff]
    %v263 = vld [vmem:[#allocation8 + $0xb0] sm:$0xff]
    %v264 = vld [vmem:[#allocation8 + $0xb8] sm:$0xff]
    %v265 = vld [vmem:[#allocation8 + $0xc0] sm:$0xff]
    %v266 = vld [vmem:[#allocation8 + $0xc8] sm:$0xff]
    %v267 = vld [vmem:[#allocation8 + $0xd0] sm:$0xff]
    %v268 = vld [vmem:[#allocation8 + $0xd8] sm:$0xff]
    %v269 = vld [vmem:[#allocation8 + $0xe0] sm:$0xff]
    %v270 = vld [vmem:[#allocation8 + $0xe8] sm:$0xff]
    %v271 = vld [vmem:[#allocation8 + $0xf0] sm:$0xff]
    %v272 = vld [vmem:[#allocation8 + $0xf8] sm:$0xff]
    %v305 = vunpack.c.l.b16 %v241
    %v306 = vunpack.c.h.b16 %v241
    %v307 = vunpack.c.l.b16 %v242
    %v308 = vunpack.c.h.b16 %v242
    %v309 = vunpack.c.l.b16 %v243
    %v310 = vunpack.c.h.b16 %v243
    %v311 = vunpack.c.l.b16 %v244
    %v312 = vunpack.c.h.b16 %v244
    %v313 = vunpack.c.l.b16 %v245
    %v314 = vunpack.c.h.b16 %v245
    %v315 = vunpack.c.l.b16 %v246
    %v316 = vunpack.c.h.b16 %v246
    %v317 = vunpack.c.l.b16 %v247
    %v318 = vunpack.c.h.b16 %v247
    %v319 = vunpack.c.l.b16 %v248
    %v320 = vunpack.c.h.b16 %v248
    %v321 = vunpack.c.l.b16 %v249
    %v322 = vunpack.c.h.b16 %v249
    %v323 = vunpack.c.l.b16 %v250
    %v324 = vunpack.c.h.b16 %v250
    %v325 = vunpack.c.l.b16 %v251
    %v326 = vunpack.c.h.b16 %v251
    %v327 = vunpack.c.l.b16 %v252
    %v328 = vunpack.c.h.b16 %v252
    %v329 = vunpack.c.l.b16 %v253
    %v330 = vunpack.c.h.b16 %v253
    %v331 = vunpack.c.l.b16 %v254
    %v332 = vunpack.c.h.b16 %v254
    %v333 = vunpack.c.l.b16 %v255
    %v334 = vunpack.c.h.b16 %v255
    %v335 = vunpack.c.l.b16 %v256
    %v336 = vunpack.c.h.b16 %v256
    %v337 = vunpack.c.l.b16 %v257
    %v338 = vunpack.c.h.b16 %v257
    %v339 = vunpack.c.l.b16 %v258
    %v340 = vunpack.c.h.b16 %v258
    %v341 = vunpack.c.l.b16 %v259
    %v342 = vunpack.c.h.b16 %v259
    %v343 = vunpack.c.l.b16 %v260
    %v344 = vunpack.c.h.b16 %v260
    %v345 = vunpack.c.l.b16 %v261
    %v346 = vunpack.c.h.b16 %v261
    %v347 = vunpack.c.l.b16 %v262
    %v348 = vunpack.c.h.b16 %v262
    %v349 = vunpack.c.l.b16 %v263
    %v350 = vunpack.c.h.b16 %v263
    %v351 = vunpack.c.l.b16 %v264
    %v352 = vunpack.c.h.b16 %v264
    %v353 = vunpack.c.l.b16 %v265
    %v354 = vunpack.c.h.b16 %v265
    %v355 = vunpack.c.l.b16 %v266
    %v356 = vunpack.c.h.b16 %v266
    %v357 = vunpack.c.l.b16 %v267
    %v358 = vunpack.c.h.b16 %v267
    %v359 = vunpack.c.l.b16 %v268
    %v360 = vunpack.c.h.b16 %v268
    %v361 = vunpack.c.l.b16 %v269
    %v362 = vunpack.c.h.b16 %v269
    %v363 = vunpack.c.l.b16 %v270
    %v364 = vunpack.c.h.b16 %v270
    %v365 = vunpack.c.l.b16 %v271
    %v366 = vunpack.c.h.b16 %v271
    %v367 = vunpack.c.l.b16 %v272
    %v368 = vunpack.c.h.b16 %v272
    %v369 = vpack.c.b16 %v307, %v305
    %v370 = vpack.c.b16 %v308, %v306
    %v371 = vpack.c.b16 %v311, %v309
    %v372 = vpack.c.b16 %v312, %v310
    %v373 = vpack.c.b16 %v315, %v313
    %v374 = vpack.c.b16 %v316, %v314
    %v375 = vpack.c.b16 %v319, %v317
    %v376 = vpack.c.b16 %v320, %v318
    %v377 = vpack.c.b16 %v323, %v321
    %v378 = vpack.c.b16 %v324, %v322
    %v379 = vpack.c.b16 %v327, %v325
    %v380 = vpack.c.b16 %v328, %v326
    %v381 = vpack.c.b16 %v331, %v329
    %v382 = vpack.c.b16 %v332, %v330
    %v383 = vpack.c.b16 %v335, %v333
    %v384 = vpack.c.b16 %v336, %v334
    %v385 = vpack.c.b16 %v339, %v337
    %v386 = vpack.c.b16 %v340, %v338
    %v387 = vpack.c.b16 %v343, %v341
    %v388 = vpack.c.b16 %v344, %v342
    %v389 = vpack.c.b16 %v347, %v345
    %v390 = vpack.c.b16 %v348, %v346
    %v391 = vpack.c.b16 %v351, %v349
    %v392 = vpack.c.b16 %v352, %v350
    %v393 = vpack.c.b16 %v355, %v353
    %v394 = vpack.c.b16 %v356, %v354
    %v395 = vpack.c.b16 %v359, %v357
    %v396 = vpack.c.b16 %v360, %v358
    %v397 = vpack.c.b16 %v363, %v361
    %v398 = vpack.c.b16 %v364, %v362
    %v399 = vpack.c.b16 %v367, %v365
    %v400 = vpack.c.b16 %v368, %v366
    %433 = vmatprep.subr.bf16.mxu0 %v370
    %434 = vmatpush1.bf16.msra.mxu0 %v369
    %435 = vmatprep.subr.bf16.mxu0 %v372
    %436 = vmatpush1.bf16.msra.mxu0 %v371
    %437 = vmatprep.subr.bf16.mxu0 %v374
    %438 = vmatpush1.bf16.msra.mxu0 %v373
    %439 = vmatprep.subr.bf16.mxu0 %v376
    %440 = vmatpush1.bf16.msra.mxu0 %v375
    %441 = vmatprep.subr.bf16.mxu0 %v378
    %442 = vmatpush1.bf16.msra.mxu0 %v377
    %443 = vmatprep.subr.bf16.mxu0 %v380
    %444 = vmatpush1.bf16.msra.mxu0 %v379
    %445 = vmatprep.subr.bf16.mxu0 %v382
    %446 = vmatpush1.bf16.msra.mxu0 %v381
    %447 = vmatprep.subr.bf16.mxu0 %v384
    %448 = vmatpush1.bf16.msra.mxu0 %v383
    %449 = vmatprep.subr.bf16.mxu0 %v386
    %450 = vmatpush1.bf16.msra.mxu0 %v385
    %451 = vmatprep.subr.bf16.mxu0 %v388
    %452 = vmatpush1.bf16.msra.mxu0 %v387
    %453 = vmatprep.subr.bf16.mxu0 %v390
    %454 = vmatpush1.bf16.msra.mxu0 %v389
    %455 = vmatprep.subr.bf16.mxu0 %v392
    %456 = vmatpush1.bf16.msra.mxu0 %v391
    %457 = vmatprep.subr.bf16.mxu0 %v394
    %458 = vmatpush1.bf16.msra.mxu0 %v393
    %459 = vmatprep.subr.bf16.mxu0 %v396
    %460 = vmatpush1.bf16.msra.mxu0 %v395
    %461 = vmatprep.subr.bf16.mxu0 %v398
    %462 = vmatpush1.bf16.msra.mxu0 %v397
    %463 = vmatprep.subr.bf16.mxu0 %v400
    %464 = vmatpush1.bf16.msra.mxu0 %v399
    %465 = vmatprep.mubr.bf16.mxu0 %v240
    %466 = vmatmul.mubr.bf16.gmra.mrb[0].mxu0 %v239
    %v467 = vpop.f32.mrb[0].mxu0
    %v468 = vadd.f32 0.0, %v467
    %v469 = vpop.f32.mrb[0].mxu0
    %v470 = vadd.f32 0.0, %v469
    %v471 = vpop.f32.mrb[0].mxu0
    %v472 = vadd.f32 0.0, %v471
    %v473 = vpop.f32.mrb[0].mxu0
    %v474 = vadd.f32 0.0, %v473
    %475 = vdwg.mxu0
    %v476 = vmul.f32 %v468, %v468
    %v477 = vmul.f32 %v472, %v472
    %v478 = vmul.f32 %v470, %v470
    %v479 = vmul.f32 %v474, %v474
    %v480 = vadd.f32 %v476, %v478
    %v481 = vadd.f32 %v477, %v479
    %v482 = vrsqrt.pop %v480
    %v483 = vmul.f32 %v480, %v482
    %vm484 = vcmp.eq.f32.partialorder %v480, inf
    %v485 = vsel %vm484, %v480, %v483
    %vm486 = vcmp.eq.f32.partialorder %v480, 0.0
    %v487 = vand.u32 %v480, 2147483648
    %v488 = vsel %vm486, %v487, %v485
    %v489 = vrsqrt.pop %v481
    %v490 = vmul.f32 %v481, %v489
    %vm491 = vcmp.eq.f32.partialorder %v481, inf
    %v492 = vsel %vm491, %v481, %v490
    %vm493 = vcmp.eq.f32.partialorder %v481, 0.0
    %v494 = vand.u32 %v481, 2147483648
    %v495 = vsel %vm493, %v494, %v492
    %496 = vst [vmem:[#allocation9] sm:$0xff] %v488
    %497 = vst [vmem:[#allocation9 + $0x8] sm:$0xff] %v495
    // Predicated region
    $region26: #{tpu_custom_call.1} parent=1 // pred_check
      _
    $region27: #{tpu_custom_call.1} parent=1 // pred_check_branch
      %499 = sbr.rel (0) target = $region29
    $region28: #{tpu_custom_call.1} parent=1 // pred_region
      %s501 = ssub.s32 256, 256
      %502 = vsyncadd [#allocation5], %s501
      %s503 = sshll.u32 [#allocation9], 4
      %s504 = int_to_ptr.vmem [resolvable:$true] %s503
      %509 = dma.vmem_to_hbm [thread:$0]  %s504, 256, %s3, [#allocation5], 128, 128, 8
    $region29: #{tpu_custom_call.1} parent=1 // pred_fallthru
      _
    // Predicated region
    $region30: #{tpu_custom_call.1} parent=1 // pred_check
      _
    $region31: #{tpu_custom_call.1} parent=1 // pred_check_branch
      %511 = sbr.rel (0) target = $region33
    $region32: #{tpu_custom_call.1} parent=1 // pred_region
      %512 = dma.done [#allocation5], 256
    $region33: #{tpu_custom_call.1} parent=1 // pred_fallthru
      _
    %513 = vsyncpa [#allocation4], 1
    %514 = vsyncpa [#allocation7], 1
    %515 = vsyncpa [#allocation5], 1

</llo_original>
